<compile_context>
chip_gen: v6e
topology: v6e:2x2x1
jax: 0.10.0
libtpu: 0.0.40
codegen_flags: <defaults>
</compile_context>

<pallas_src>
import functools

import jax
import jax.numpy as jnp
from jax.experimental import pallas as pl
from jax.experimental.pallas import tpu as pltpu


def _round_up(x: int, m: int) -> int:
    return ((x + m - 1) // m) * m


def _make_kernel(n_layers: int, size: int, fused_hidden: bool, compute_dtype):
    """min(Q1(x), Q2(x)) over one lane-dense batch tile (batch on lanes)."""
    assert n_layers >= 1, "kernel assumes at least one hidden layer"

    def kernel(x_ref, *refs):
        out_ref = refs[-1]                       # [1, TB]        f32
        b_ref = refs[-2]                         # [2s, L+1]      f32 packed biases
        w_refs = refs[:-2]                       # transposed weights (compute_dtype)

        cd = compute_dtype
        b_all = b_ref[...]
        x = x_ref[...].astype(cd)                # [D, TB]

        # Layer 0: Q1/Q2 fused along the output rows (no zero blocks).
        h = jnp.dot(w_refs[0][...], x, preferred_element_type=jnp.float32)
        h = jnp.maximum(h + b_all[:, 0:1], 0.0)  # [2s, TB]

        if fused_hidden:
            # 2*size <= 128: block-diagonal fusion is free (lanes pad to 128).
            for l in range(1, n_layers):
                h = jnp.dot(w_refs[l][...], h.astype(cd),
                            preferred_element_type=jnp.float32)
                h = jnp.maximum(h + b_all[:, l:l + 1], 0.0)
            y = jnp.dot(w_refs[n_layers][...], h.astype(cd),
                        preferred_element_type=jnp.float32)       # [2, TB]
            y = y + b_all[0:2, n_layers:n_layers + 1]
            out_ref[...] = jnp.min(y, axis=0, keepdims=True)      # [1, TB]
        else:
            # 2*size > 128: run the two critics' hidden stacks separately so no
            # MXU FLOPs / weight bytes are spent on zero off-diagonal blocks.
            h1, h2 = h[:size], h[size:]
            for l in range(1, n_layers):
                w1 = w_refs[2 * l - 1][...]
                w2 = w_refs[2 * l][...]
                h1 = jnp.maximum(
                    jnp.dot(w1, h1.astype(cd), preferred_element_type=jnp.float32)
                    + b_all[:size, l:l + 1], 0.0)
                h2 = jnp.maximum(
                    jnp.dot(w2, h2.astype(cd), preferred_element_type=jnp.float32)
                    + b_all[size:, l:l + 1], 0.0)
            w1o = w_refs[2 * n_layers - 1][...]                    # [1, s]
            w2o = w_refs[2 * n_layers][...]                        # [1, s]
            q1 = (jnp.dot(w1o, h1.astype(cd), preferred_element_type=jnp.float32)
                  + b_all[0:1, n_layers:n_layers + 1])
            q2 = (jnp.dot(w2o, h2.astype(cd), preferred_element_type=jnp.float32)
                  + b_all[1:2, n_layers:n_layers + 1])
            out_ref[...] = jnp.minimum(q1, q2)                     # [1, TB]

    return kernel


def _pack_params(q1_params, q2_params, n_layers, size, compute_dtype):
    """Transpose + fuse the two critics' parameters for the lane-dense kernel."""
    s, two_s = size, 2 * size
    fused_hidden = two_s <= 128
    cd = compute_dtype

    def w_t(p):  # [in, out] -> [out, in], f32
        return jnp.asarray(p, jnp.float32).T

    weights = []
    # Layer 0: stack Q1/Q2 output rows; shares the [D, TB] input, zero-free.
    weights.append(jnp.concatenate(
        [w_t(q1_params[0]), w_t(q2_params[0])], axis=0).astype(cd))       # [2s, D]

    if fused_hidden:
        z = jnp.zeros((s, s), jnp.float32)
        for l in range(1, n_layers):
            w1, w2 = w_t(q1_params[2 * l]), w_t(q2_params[2 * l])
            weights.append(jnp.concatenate(
                [jnp.concatenate([w1, z], axis=1),
                 jnp.concatenate([z, w2], axis=1)], axis=0).astype(cd))   # [2s, 2s]
        z1 = jnp.zeros((1, s), jnp.float32)
        w1o, w2o = w_t(q1_params[2 * n_layers]), w_t(q2_params[2 * n_layers])
        weights.append(jnp.concatenate(
            [jnp.concatenate([w1o, z1], axis=1),
             jnp.concatenate([z1, w2o], axis=1)], axis=0).astype(cd))     # [2, 2s]
    else:
        for l in range(1, n_layers):
            weights.append(w_t(q1_params[2 * l]).astype(cd))              # [s, s]
            weights.append(w_t(q2_params[2 * l]).astype(cd))              # [s, s]
        weights.append(w_t(q1_params[2 * n_layers]).astype(cd))           # [1, s]
        weights.append(w_t(q2_params[2 * n_layers]).astype(cd))           # [1, s]

    # All biases packed into one resident [2s, n_layers+1] f32 tile:
    #   col l < n_layers : rows [:s] = Q1 hidden bias, rows [s:] = Q2 hidden bias
    #   col n_layers     : row 0 = Q1 output bias, row 1 = Q2 output bias
    cols = []
    for l in range(n_layers):
        b1 = jnp.reshape(jnp.asarray(q1_params[2 * l + 1], jnp.float32), (s,))
        b2 = jnp.reshape(jnp.asarray(q2_params[2 * l + 1], jnp.float32), (s,))
        cols.append(jnp.concatenate([b1, b2])[:, None])
    b1o = jnp.reshape(jnp.asarray(q1_params[2 * n_layers + 1], jnp.float32), (1,))
    b2o = jnp.reshape(jnp.asarray(q2_params[2 * n_layers + 1], jnp.float32), (1,))
    cols.append(jnp.concatenate(
        [b1o, b2o, jnp.zeros((two_s - 2,), jnp.float32)])[:, None])
    b_pack = jnp.concatenate(cols, axis=1)                                # [2s, L+1]
    return weights, b_pack, fused_hidden


def sac_critic_forward(ob_no, ac_na, q1_params, q2_params, *,
                       block_b=512, use_bf16=False):
    """Pallas-backed forward: min(Q1([ob, ac]), Q2([ob, ac])) -> [B]."""
    ob = jnp.asarray(ob_no, jnp.float32)
    ac = jnp.asarray(ac_na, jnp.float32)
    batch, ob_dim = ob.shape
    ac_dim = ac.shape[1]
    d = ob_dim + ac_dim
    n_layers = len(q1_params) // 2 - 1
    size = q1_params[0].shape[1]
    compute_dtype = jnp.bfloat16 if use_bf16 else jnp.float32

    weights, b_pack, fused_hidden = _pack_params(
        q1_params, q2_params, n_layers, size, compute_dtype)

    # Lane-dense batch tiling: TB is a multiple of 128 (unmasked full-lane
    # output stores); for large batches aim for >= 2 grid steps so v7x's
    # second TensorCore gets work, capped at block_b for overhead amortization.
    tb = max(128, min(_round_up(block_b, 128),
                      _round_up(pl.cdiv(batch, 2), 128)))
    num_tiles = pl.cdiv(batch, tb)

    # Single concatenated + transposed input (one DMA stream, batch on lanes);
    # the concat matches torch.cat([ob, ac], dim=1).
    x_t = jnp.concatenate([ob, ac], axis=1).T.astype(compute_dtype)       # [D, B]

    in_specs = [pl.BlockSpec((d, tb), lambda i: (0, i))]
    # Constant index_map -> weights/biases stay resident across grid steps.
    in_specs += [pl.BlockSpec(w.shape, lambda i: (0, 0)) for w in weights]
    in_specs += [pl.BlockSpec(b_pack.shape, lambda i: (0, 0))]
    out_specs = pl.BlockSpec((1, tb), lambda i: (0, i))

    two_s = 2 * size
    if fused_hidden:
        per_row = d * two_s + (n_layers - 1) * two_s * two_s + 2 * two_s
    else:
        per_row = d * two_s + (n_layers - 1) * 2 * size * size + 2 * size
    wbytes = 2 if use_bf16 else 4
    flops = 2 * batch * per_row
    bytes_accessed = (wbytes * (batch * d + sum(int(w.size) for w in weights))
                      + 4 * (int(b_pack.size) + batch))

    out = pl.pallas_call(
        _make_kernel(n_layers, size, fused_hidden, compute_dtype),
        out_shape=jax.ShapeDtypeStruct((1, num_tiles * tb), jnp.float32),
        grid=(num_tiles,),
        in_specs=in_specs,
        out_specs=out_specs,
        compiler_params=pltpu.CompilerParams(
            dimension_semantics=("parallel",)),
        cost_estimate=pl.CostEstimate(
            flops=flops, transcendentals=0, bytes_accessed=bytes_accessed),
    )(x_t, *weights, b_pack)
    return out[0, :batch]                                                 # [B]


def init_mlp_params(key, in_dim, out_dim, n_layers, size):
    """Deterministic init of an MLP matching ptu.build_mlp layer shapes."""
    dims = [in_dim] + [size] * n_layers + [out_dim]
    params = []
    for i in range(len(dims) - 1):
        key, wk, bk = jax.random.split(key, 3)
        bound = 1.0 / jnp.sqrt(dims[i])
        w = jax.random.uniform(wk, (dims[i], dims[i + 1]), jnp.float32, -bound, bound)
        b = jax.random.uniform(bk, (1, dims[i + 1]), jnp.float32, -bound, bound)
        params += [w, b]
    return params, key


def reference_forward(ob_no, ac_na, q1_params, q2_params, n_layers):
    """Pure-JAX reference (unfused, concat-based) for correctness checking."""
    x = jnp.concatenate([ob_no, ac_na], axis=1)
    hp = jax.lax.Precision.HIGHEST

    def mlp(params, h):
        for l in range(n_layers):
            h = jnp.maximum(
                jnp.dot(h, params[2 * l], precision=hp) + params[2 * l + 1], 0.0)
        return jnp.dot(h, params[2 * n_layers], precision=hp) + params[2 * n_layers + 1]

    q1 = mlp(q1_params, x)[:, 0]
    q2 = mlp(q2_params, x)[:, 0]
    return jnp.minimum(q1, q2)


if __name__ == "__main__":
    key = jax.random.PRNGKey(0)

    def make_case(key, batch, ob_dim, ac_dim, size, n_layers):
        key, k_ob, k_ac = jax.random.split(key, 3)
        ob = jax.random.normal(k_ob, (batch, ob_dim), jnp.float32)
        ac = jax.random.normal(k_ac, (batch, ac_dim), jnp.float32)
        q1p, key = init_mlp_params(key, ob_dim + ac_dim, 1, n_layers, size)
        q2p, key = init_mlp_params(key, ob_dim + ac_dim, 1, n_layers, size)
        return key, ob, ac, q1p, q2p

    # --- test 1: fused-hidden path (2*size <= 128), batch smaller than a tile
    key, ob, ac, q1p, q2p = make_case(key, 8, 8, 4, 32, 2)
    q = jax.block_until_ready(jax.jit(sac_critic_forward)(ob, ac, q1p, q2p))
    q_ref = reference_forward(ob, ac, q1p, q2p, 2)
    assert q.shape == (8,), q.shape
    assert jnp.allclose(q, q_ref, atol=1e-4, rtol=1e-4), (q, q_ref)

    # --- test 2: two grid steps with a partial last tile (v7x-friendly tiling)
    key, ob2, ac2, _, _ = make_case(key, 200, 8, 4, 32, 2)
    q2v = jax.block_until_ready(jax.jit(sac_critic_forward)(ob2, ac2, q1p, q2p))
    q2_ref = reference_forward(ob2, ac2, q1p, q2p, 2)
    assert q2v.shape == (200,), q2v.shape
    assert jnp.allclose(q2v, q2_ref, atol=1e-4, rtol=1e-4)

    # --- test 3: unfused-hidden path (2*size > 128)
    key, ob3, ac3, q1p3, q2p3 = make_case(key, 64, 8, 4, 128, 2)
    q3 = jax.block_until_ready(jax.jit(sac_critic_forward)(ob3, ac3, q1p3, q2p3))
    q3_ref = reference_forward(ob3, ac3, q1p3, q2p3, 2)
    assert q3.shape == (64,), q3.shape
    assert jnp.allclose(q3, q3_ref, atol=1e-4, rtol=1e-4)

    # --- test 4: bf16 matmul operands, f32 accumulation (relaxed tolerance)
    fwd_bf16 = jax.jit(functools.partial(sac_critic_forward, use_bf16=True))
    q4 = jax.block_until_ready(fwd_bf16(ob2, ac2, q1p, q2p))
    assert q4.shape == (200,), q4.shape
    assert jnp.allclose(q4, q2_ref, atol=5e-2, rtol=5e-2)

    print("KERNEL_OK")
</pallas_src>

<mosaic_0001>
module attributes {stable_mosaic.version = 11 : i64} {
  func.func @kernel(%arg0: i32, %arg1: memref<12x128xf32, #tpu.memory_space<vmem>>, %arg2: memref<64x12xf32, #tpu.memory_space<vmem>>, %arg3: memref<64x64xf32, #tpu.memory_space<vmem>>, %arg4: memref<2x64xf32, #tpu.memory_space<vmem>>, %arg5: memref<64x3xf32, #tpu.memory_space<vmem>>, %arg6: memref<1x128xf32, #tpu.memory_space<vmem>>) attributes {dimension_semantics = [#tpu.dimension_semantics<parallel>], iteration_bounds = array<i64: 1>, scalar_prefetch = 0 : i64, scratch_operands = 0 : i64, tpu.core_type = #tpu.core_type<tc>, window_params = [{transform_indices = @transform_0, window_bounds = array<i64: 12, 128>}, {pipeline_mode = #tpu.pipeline_mode<synchronous>, transform_indices = @transform_1, window_bounds = array<i64: 64, 12>}, {pipeline_mode = #tpu.pipeline_mode<synchronous>, transform_indices = @transform_2, window_bounds = array<i64: 64, 64>}, {pipeline_mode = #tpu.pipeline_mode<synchronous>, transform_indices = @transform_3, window_bounds = array<i64: 2, 64>}, {pipeline_mode = #tpu.pipeline_mode<synchronous>, transform_indices = @transform_4, window_bounds = array<i64: 64, 3>}, {transform_indices = @transform_5, window_bounds = array<i64: 1, 128>}]} {
    %c0 = arith.constant 0 : index
    %c0_0 = arith.constant 0 : index
    %0 = vector.load %arg5[%c0, %c0_0] : memref<64x3xf32, #tpu.memory_space<vmem>>, vector<64x3xf32>
    %c0_1 = arith.constant 0 : index
    %c0_2 = arith.constant 0 : index
    %1 = vector.load %arg1[%c0_1, %c0_2] : memref<12x128xf32, #tpu.memory_space<vmem>>, vector<12x128xf32>
    %c0_3 = arith.constant 0 : index
    %c0_4 = arith.constant 0 : index
    %2 = vector.load %arg2[%c0_3, %c0_4] : memref<64x12xf32, #tpu.memory_space<vmem>>, vector<64x12xf32>
    %cst = arith.constant dense<0.000000e+00> : vector<64x128xf32>
    %3 = tpu.matmul %2, %1, %cst {dimension_numbers = #tpu.dot_dimension_numbers<[1], [0], [0], [1], [0, 0, 1, 1], [], []>} : vector<64x12xf32>, vector<12x128xf32>, vector<64x128xf32> -> vector<64x128xf32>
    %4 = vector.extract_strided_slice %0 {offsets = [0, 0], sizes = [64, 1], strides = [1, 1]} : vector<64x3xf32> to vector<64x1xf32>
    %5 = vector.broadcast %4 : vector<64x1xf32> to vector<64x128xf32>
    %6 = arith.addf %3, %5 : vector<64x128xf32>
    %cst_5 = arith.constant 0.000000e+00 : f32
    %7 = vector.broadcast %cst_5 : f32 to vector<64x128xf32>
    %8 = arith.maximumf %6, %7 : vector<64x128xf32>
    %c0_6 = arith.constant 0 : index
    %c0_7 = arith.constant 0 : index
    %9 = vector.load %arg3[%c0_6, %c0_7] : memref<64x64xf32, #tpu.memory_space<vmem>>, vector<64x64xf32>
    %cst_8 = arith.constant dense<0.000000e+00> : vector<64x128xf32>
    %10 = tpu.matmul %9, %8, %cst_8 {dimension_numbers = #tpu.dot_dimension_numbers<[1], [0], [0], [1], [0, 0, 1, 1], [], []>} : vector<64x64xf32>, vector<64x128xf32>, vector<64x128xf32> -> vector<64x128xf32>
    %11 = vector.extract_strided_slice %0 {offsets = [0, 1], sizes = [64, 1], strides = [1, 1]} : vector<64x3xf32> to vector<64x1xf32>
    %12 = vector.broadcast %11 : vector<64x1xf32> to vector<64x128xf32>
    %13 = arith.addf %10, %12 : vector<64x128xf32>
    %cst_9 = arith.constant 0.000000e+00 : f32
    %14 = vector.broadcast %cst_9 : f32 to vector<64x128xf32>
    %15 = arith.maximumf %13, %14 : vector<64x128xf32>
    %c0_10 = arith.constant 0 : index
    %c0_11 = arith.constant 0 : index
    %16 = vector.load %arg4[%c0_10, %c0_11] : memref<2x64xf32, #tpu.memory_space<vmem>>, vector<2x64xf32>
    %cst_12 = arith.constant dense<0.000000e+00> : vector<2x128xf32>
    %17 = tpu.matmul %16, %15, %cst_12 {dimension_numbers = #tpu.dot_dimension_numbers<[1], [0], [0], [1], [0, 0, 1, 1], [], []>} : vector<2x64xf32>, vector<64x128xf32>, vector<2x128xf32> -> vector<2x128xf32>
    %18 = vector.extract_strided_slice %0 {offsets = [0, 2], sizes = [2, 1], strides = [1, 1]} : vector<64x3xf32> to vector<2x1xf32>
    %19 = vector.broadcast %18 : vector<2x1xf32> to vector<2x128xf32>
    %20 = arith.addf %17, %19 : vector<2x128xf32>
    %cst_13 = arith.constant dense<0x7F800000> : vector<128xf32>
    %21 = vector.multi_reduction <minimumf>, %20, %cst_13 [0] : vector<2x128xf32> to vector<128xf32>
    %22 = vector.shape_cast %21 : vector<128xf32> to vector<1x128xf32>
    %c0_14 = arith.constant 0 : index
    %c0_15 = arith.constant 0 : index
    %23 = vector.load %arg6[%c0_14, %c0_15] : memref<1x128xf32, #tpu.memory_space<vmem>>, vector<1x128xf32>
    tpu.vector_store %arg6[%c0_14, %c0_15], %22 {strides = array<i32>} : memref<1x128xf32, #tpu.memory_space<vmem>>, vector<1x128xf32>,
    return
  }
  func.func @transform_0(%arg0: i32) -> (i32, i32) {
    %c0_i32 = arith.constant 0 : i32
    %c0_i32_0 = arith.constant 0 : i32
    return %c0_i32, %arg0 : i32, i32
  }
  func.func @transform_1(%arg0: i32) -> (i32, i32) {
    %c0_i32 = arith.constant 0 : i32
    %c0_i32_0 = arith.constant 0 : i32
    %c0_i32_1 = arith.constant 0 : i32
    return %c0_i32, %c0_i32_0 : i32, i32
  }
  func.func @transform_2(%arg0: i32) -> (i32, i32) {
    %c0_i32 = arith.constant 0 : i32
    %c0_i32_0 = arith.constant 0 : i32
    %c0_i32_1 = arith.constant 0 : i32
    return %c0_i32, %c0_i32_0 : i32, i32
  }
  func.func @transform_3(%arg0: i32) -> (i32, i32) {
    %c0_i32 = arith.constant 0 : i32
    %c0_i32_0 = arith.constant 0 : i32
    %c0_i32_1 = arith.constant 0 : i32
    return %c0_i32, %c0_i32_0 : i32, i32
  }
  func.func @transform_4(%arg0: i32) -> (i32, i32) {
    %c0_i32 = arith.constant 0 : i32
    %c0_i32_0 = arith.constant 0 : i32
    %c0_i32_1 = arith.constant 0 : i32
    return %c0_i32, %c0_i32_0 : i32, i32
  }
  func.func @transform_5(%arg0: i32) -> (i32, i32) {
    %c0_i32 = arith.constant 0 : i32
    %c0_i32_0 = arith.constant 0 : i32
    return %c0_i32, %arg0 : i32, i32
  }
}

</mosaic_0001>

<llo_original>
// kernel: sac_critic_forward.1
$region0: #{sac_critic_forward.1}
  #allocation0 [shape = 'u32[]', space=smem, size = 0x4, offset = 0x4, fixed_abs, tag = 'smem constant byte address 0x4 - core index']
  #allocation1 [shape = 'u32[144,128]{1,0:T(1,128)}', space=vmem, size = 0x12000, scoped, tag = 'internal scratch']
  %s0 = inlined_call_operand.vmem [shape: f32[12,8], index: 0, kind: input, shape index: {}]
  %s1 = inlined_call_operand.vmem [shape: f32[64,12], index: 1, kind: input, shape index: {}]
  %s2 = inlined_call_operand.vmem [shape: f32[64,64], index: 2, kind: input, shape index: {}]
  %s3 = inlined_call_operand.vmem [shape: f32[2,64], index: 3, kind: input, shape index: {}]
  %s4 = inlined_call_operand.vmem [shape: f32[64,3], index: 4, kind: input, shape index: {}]
  %s5 = inlined_call_operand.vmem [shape: f32[1,128], index: 5, kind: output, shape index: {}]
  %s6 = sld [smem:[#allocation0]]
  $region30: #{sac_critic_forward.1} parent=0
    _
  %s8 = ssub.s32 1, %s6
  %s9 = scalar_select 0, %s8, %s6
  // Predicated region
  $region2: #{sac_critic_forward.1} parent=0 // pred_check
    _
  $region3: #{sac_critic_forward.1} parent=0 // pred_check_branch
    %11 = sbr.rel (0) target = $region5
  $region4: #{sac_critic_forward.1} parent=0 // pred_region
    _
  $region5: #{sac_critic_forward.1} parent=0 // pred_fallthru
    _
  // Predicated region
  $region6: #{sac_critic_forward.1} parent=0 // pred_check
    _
  $region7: #{sac_critic_forward.1} parent=0 // pred_check_branch
    %13 = sbr.rel (0) target = $region9
  $region8: #{sac_critic_forward.1} parent=0 // pred_region
    _
  $region9: #{sac_critic_forward.1} parent=0 // pred_fallthru
    _
  // Predicated region
  $region10: #{sac_critic_forward.1} parent=0 // pred_check
    _
  $region11: #{sac_critic_forward.1} parent=0 // pred_check_branch
    %15 = sbr.rel (0) target = $region13
  $region12: #{sac_critic_forward.1} parent=0 // pred_region
    _
  $region13: #{sac_critic_forward.1} parent=0 // pred_fallthru
    _
  // Predicated region
  $region14: #{sac_critic_forward.1} parent=0 // pred_check
    _
  $region15: #{sac_critic_forward.1} parent=0 // pred_check_branch
    %17 = sbr.rel (0) target = $region17
  $region16: #{sac_critic_forward.1} parent=0 // pred_region
    _
  $region17: #{sac_critic_forward.1} parent=0 // pred_fallthru
    _
  // Predicated region
  $region18: #{sac_critic_forward.1} parent=0 // pred_check
    _
  $region19: #{sac_critic_forward.1} parent=0 // pred_check_branch
    %19 = sbr.rel (0) target = $region21
  $region20: #{sac_critic_forward.1} parent=0 // pred_region
    _
  $region21: #{sac_critic_forward.1} parent=0 // pred_fallthru
    _
  %v20 = vld [vmem:[%s4] sm:$0xff]
  %v21 = vld [vmem:[%s4 + $0x8] sm:$0xff]
  %v22 = vld [vmem:[%s4 + $0x10] sm:$0xff]
  %v23 = vld [vmem:[%s4 + $0x18] sm:$0xff]
  %v24 = vld [vmem:[%s4 + $0x20] sm:$0xff]
  %v25 = vld [vmem:[%s4 + $0x28] sm:$0xff]
  %v26 = vld [vmem:[%s4 + $0x30] sm:$0xff]
  %v27 = vld [vmem:[%s4 + $0x38] sm:$0xff]
  %v28 = vld [vmem:[%s0] sm:$0xff]
  %v29 = vld [vmem:[%s0 + $0x8] sm:$0xf]
  %v30 = vld [vmem:[%s1] sm:$0xff]
  %v31 = vld [vmem:[%s1 + $0x8] sm:$0xff]
  %v32 = vld [vmem:[%s1 + $0x10] sm:$0xff]
  %v33 = vld [vmem:[%s1 + $0x18] sm:$0xff]
  %v34 = vld [vmem:[%s1 + $0x20] sm:$0xff]
  %v35 = vld [vmem:[%s1 + $0x28] sm:$0xff]
  %v36 = vld [vmem:[%s1 + $0x30] sm:$0xff]
  %v37 = vld [vmem:[%s1 + $0x38] sm:$0xff]
  %39 = vset.pattern.permute.xlu0 0
  %40 = vperm.xlu0 %39, %v20
  %v41 = vpop.permute.xlu0 %40
  %44 = vset.pattern.permute.xlu0 0
  %45 = vperm.xlu0 %44, %v21
  %v46 = vpop.permute.xlu0 %45
  %49 = vset.pattern.permute.xlu0 0
  %50 = vperm.xlu0 %49, %v22
  %v51 = vpop.permute.xlu0 %50
  %54 = vset.pattern.permute.xlu0 0
  %55 = vperm.xlu0 %54, %v23
  %v56 = vpop.permute.xlu0 %55
  %59 = vset.pattern.permute.xlu0 0
  %60 = vperm.xlu0 %59, %v24
  %v61 = vpop.permute.xlu0 %60
  %64 = vset.pattern.permute.xlu0 0
  %65 = vperm.xlu0 %64, %v25
  %v66 = vpop.permute.xlu0 %65
  %69 = vset.pattern.permute.xlu0 0
  %70 = vperm.xlu0 %69, %v26
  %v71 = vpop.permute.xlu0 %70
  %74 = vset.pattern.permute.xlu0 0
  %75 = vperm.xlu0 %74, %v27
  %v76 = vpop.permute.xlu0 %75
  %vm78 = vcmask 97280
  %v80 = vsel %vm78, %v30, 0
  %v83 = vsel %vm78, %v31, 0
  %v86 = vsel %vm78, %v32, 0
  %v89 = vsel %vm78, %v33, 0
  %v92 = vsel %vm78, %v34, 0
  %v95 = vsel %vm78, %v35, 0
  %v98 = vsel %vm78, %v36, 0
  %v101 = vsel %vm78, %v37, 0
  %vm103 = vcmask 1043456
  %v105 = vsel %vm103, %v29, 0
  %107 = vmatprep.subr.mxu0 0.0
  %108 = vmatpush1.msra.mxu0 0.0
  %109 = vmatprep.subr.mxu0 0.0
  %110 = vmatpush1.msra.mxu0 0.0
  %111 = vmatprep.subr.mxu0 0.0
  %112 = vmatpush1.msra.mxu0 0.0
  %113 = vmatprep.subr.mxu0 0.0
  %114 = vmatpush1.msra.mxu0 0.0
  %115 = vmatprep.subr.mxu0 0.0
  %116 = vmatpush1.msra.mxu0 0.0
  %117 = vmatprep.subr.mxu0 0.0
  %118 = vmatpush1.msra.mxu0 0.0
  %119 = vmatprep.subr.mxu0 0.0
  %120 = vmatpush1.msra.mxu0 0.0
  %121 = vmatprep.subr.mxu0 0.0
  %122 = vmatpush1.msra.mxu0 0.0
  %123 = vmatprep.subr.mxu0 0.0
  %124 = vmatpush1.msra.mxu0 0.0
  %125 = vmatprep.subr.mxu0 0.0
  %126 = vmatpush1.msra.mxu0 0.0
  %127 = vmatprep.subr.mxu0 0.0
  %128 = vmatpush1.msra.mxu0 0.0
  %129 = vmatprep.subr.mxu0 0.0
  %130 = vmatpush1.msra.mxu0 0.0
  %131 = vmatprep.subr.mxu0 0.0
  %132 = vmatpush1.msra.mxu0 0.0
  %133 = vmatprep.subr.mxu0 0.0
  %134 = vmatpush1.msra.mxu0 0.0
  %135 = vmatprep.subr.mxu0 0.0
  %136 = vmatpush1.msra.mxu0 %v105
  %137 = vmatprep.subr.mxu0 0.0
  %138 = vmatpush1.msra.mxu0 %v28
  %139 = vmatprep.subr.mxu0 0.0
  %140 = vmatpush2.msra.mxu0 0.0
  %141 = vmatprep.subr.mxu0 0.0
  %142 = vmatpush2.msra.mxu0 0.0
  %143 = vmatprep.subr.mxu0 0.0
  %144 = vmatpush2.msra.mxu0 0.0
  %145 = vmatprep.subr.mxu0 0.0
  %146 = vmatpush2.msra.mxu0 0.0
  %147 = vmatprep.subr.mxu0 0.0
  %148 = vmatpush2.msra.mxu0 0.0
  %149 = vmatprep.subr.mxu0 0.0
  %150 = vmatpush2.msra.mxu0 0.0
  %151 = vmatprep.subr.mxu0 0.0
  %152 = vmatpush2.msra.mxu0 0.0
  %153 = vmatprep.subr.mxu0 0.0
  %154 = vmatpush2.msra.mxu0 0.0
  %155 = vmatprep.subr.mxu0 0.0
  %156 = vmatpush2.msra.mxu0 0.0
  %157 = vmatprep.subr.mxu0 0.0
  %158 = vmatpush2.msra.mxu0 0.0
  %159 = vmatprep.subr.mxu0 0.0
  %160 = vmatpush2.msra.mxu0 0.0
  %161 = vmatprep.subr.mxu0 0.0
  %162 = vmatpush2.msra.mxu0 0.0
  %163 = vmatprep.subr.mxu0 0.0
  %164 = vmatpush2.msra.mxu0 0.0
  %165 = vmatprep.subr.mxu0 0.0
  %166 = vmatpush2.msra.mxu0 0.0
  %167 = vmatprep.subr.mxu0 0.0
  %168 = vmatpush2.msra.mxu0 0.0
  %169 = vmatprep.subr.mxu0 0.0
  %170 = vmatpush2.msra.mxu0 0.0
  %171 = vmatprep.mubr.f32.mxu0 0.0
  %172 = vmatmul.mubr.f32.gmra.mxu0 %v80
  %v173 = vpop.f32.mrf.mxu0
  %v174 = vadd.f32 %v41, %v173
  %v175 = vpop.f32.mrf.mxu0
  %176 = vmatprep.mubr.f32.mxu0 0.0
  %177 = vmatmul.mubr.f32.gmra.mxu0 %v83
  %v178 = vpop.f32.mrf.mxu0
  %v179 = vadd.f32 %v46, %v178
  %v180 = vpop.f32.mrf.mxu0
  %181 = vmatprep.mubr.f32.mxu0 0.0
  %182 = vmatmul.mubr.f32.gmra.mxu0 %v86
  %v183 = vpop.f32.mrf.mxu0
  %v184 = vadd.f32 %v51, %v183
  %v185 = vpop.f32.mrf.mxu0
  %186 = vmatprep.mubr.f32.mxu0 0.0
  %187 = vmatmul.mubr.f32.gmra.mxu0 %v89
  %v188 = vpop.f32.mrf.mxu0
  %v189 = vadd.f32 %v56, %v188
  %v190 = vpop.f32.mrf.mxu0
  %191 = vmatprep.mubr.f32.mxu0 0.0
  %192 = vmatmul.mubr.f32.gmra.mxu0 %v92
  %v193 = vpop.f32.mrf.mxu0
  %v194 = vadd.f32 %v61, %v193
  %v195 = vpop.f32.mrf.mxu0
  %196 = vmatprep.mubr.f32.mxu0 0.0
  %197 = vmatmul.mubr.f32.gmra.mxu0 %v95
  %v198 = vpop.f32.mrf.mxu0
  %v199 = vadd.f32 %v66, %v198
  %v200 = vpop.f32.mrf.mxu0
  %201 = vmatprep.mubr.f32.mxu0 0.0
  %202 = vmatmul.mubr.f32.gmra.mxu0 %v98
  %v203 = vpop.f32.mrf.mxu0
  %v204 = vadd.f32 %v71, %v203
  %v205 = vpop.f32.mrf.mxu0
  %206 = vmatprep.mubr.f32.mxu0 0.0
  %207 = vmatmul.mubr.f32.gmra.mxu0 %v101
  %v208 = vpop.f32.mrf.mxu0
  %v209 = vadd.f32 %v76, %v208
  %v210 = vpop.f32.mrf.mxu0
  %211 = vdwg.mxu0
  %v212 = vmax.f32 %v174, 0.0
  %v213 = vmax.f32 %v179, 0.0
  %v214 = vmax.f32 %v184, 0.0
  %v215 = vmax.f32 %v189, 0.0
  %v216 = vmax.f32 %v194, 0.0
  %v217 = vmax.f32 %v199, 0.0
  %v218 = vmax.f32 %v204, 0.0
  %v219 = vmax.f32 %v209, 0.0
  %v220 = vld [vmem:[%s2] sm:$0xff]
  %v221 = vld [vmem:[%s2 + $0x8] sm:$0xff]
  %v222 = vld [vmem:[%s2 + $0x10] sm:$0xff]
  %v223 = vld [vmem:[%s2 + $0x18] sm:$0xff]
  %v224 = vld [vmem:[%s2 + $0x20] sm:$0xff]
  %v225 = vld [vmem:[%s2 + $0x28] sm:$0xff]
  %v226 = vld [vmem:[%s2 + $0x30] sm:$0xff]
  %v227 = vld [vmem:[%s2 + $0x38] sm:$0xff]
  %228 = vset.pattern.permute.xlu0 1
  %229 = vperm.xlu0 %228, %v20
  %v230 = vpop.permute.xlu0 %229
  %232 = vset.pattern.permute.xlu0 1
  %233 = vperm.xlu0 %232, %v21
  %v234 = vpop.permute.xlu0 %233
  %236 = vset.pattern.permute.xlu0 1
  %237 = vperm.xlu0 %236, %v22
  %v238 = vpop.permute.xlu0 %237
  %240 = vset.pattern.permute.xlu0 1
  %241 = vperm.xlu0 %240, %v23
  %v242 = vpop.permute.xlu0 %241
  %244 = vset.pattern.permute.xlu0 1
  %245 = vperm.xlu0 %244, %v24
  %v246 = vpop.permute.xlu0 %245
  %248 = vset.pattern.permute.xlu0 1
  %249 = vperm.xlu0 %248, %v25
  %v250 = vpop.permute.xlu0 %249
  %252 = vset.pattern.permute.xlu0 1
  %253 = vperm.xlu0 %252, %v26
  %v254 = vpop.permute.xlu0 %253
  %256 = vset.pattern.permute.xlu0 1
  %257 = vperm.xlu0 %256, %v27
  %v258 = vpop.permute.xlu0 %257
  %vm260 = vcmask 523264
  %v262 = vsel %vm260, %v220, 0
  %v265 = vsel %vm260, %v221, 0
  %v268 = vsel %vm260, %v222, 0
  %v271 = vsel %vm260, %v223, 0
  %v274 = vsel %vm260, %v224, 0
  %v277 = vsel %vm260, %v225, 0
  %v280 = vsel %vm260, %v226, 0
  %v283 = vsel %vm260, %v227, 0
  %285 = vmatprep.subr.mxu0 0.0
  %286 = vmatpush1.msra.mxu0 0.0
  %287 = vmatprep.subr.mxu0 0.0
  %288 = vmatpush1.msra.mxu0 0.0
  %289 = vmatprep.subr.mxu0 0.0
  %290 = vmatpush1.msra.mxu0 0.0
  %291 = vmatprep.subr.mxu0 0.0
  %292 = vmatpush1.msra.mxu0 0.0
  %293 = vmatprep.subr.mxu0 0.0
  %294 = vmatpush1.msra.mxu0 0.0
  %295 = vmatprep.subr.mxu0 0.0
  %296 = vmatpush1.msra.mxu0 0.0
  %297 = vmatprep.subr.mxu0 0.0
  %298 = vmatpush1.msra.mxu0 0.0
  %299 = vmatprep.subr.mxu0 0.0
  %300 = vmatpush1.msra.mxu0 0.0
  %301 = vmatprep.subr.mxu0 0.0
  %302 = vmatpush1.msra.mxu0 %v219
  %303 = vmatprep.subr.mxu0 0.0
  %304 = vmatpush1.msra.mxu0 %v218
  %305 = vmatprep.subr.mxu0 0.0
  %306 = vmatpush1.msra.mxu0 %v217
  %307 = vmatprep.subr.mxu0 0.0
  %308 = vmatpush1.msra.mxu0 %v216
  %309 = vmatprep.subr.mxu0 0.0
  %310 = vmatpush1.msra.mxu0 %v215
  %311 = vmatprep.subr.mxu0 0.0
  %312 = vmatpush1.msra.mxu0 %v214
  %313 = vmatprep.subr.mxu0 0.0
  %314 = vmatpush1.msra.mxu0 %v213
  %315 = vmatprep.subr.mxu0 0.0
  %316 = vmatpush1.msra.mxu0 %v212
  %317 = vmatprep.subr.mxu0 0.0
  %318 = vmatpush2.msra.mxu0 0.0
  %319 = vmatprep.subr.mxu0 0.0
  %320 = vmatpush2.msra.mxu0 0.0
  %321 = vmatprep.subr.mxu0 0.0
  %322 = vmatpush2.msra.mxu0 0.0
  %323 = vmatprep.subr.mxu0 0.0
  %324 = vmatpush2.msra.mxu0 0.0
  %325 = vmatprep.subr.mxu0 0.0
  %326 = vmatpush2.msra.mxu0 0.0
  %327 = vmatprep.subr.mxu0 0.0
  %328 = vmatpush2.msra.mxu0 0.0
  %329 = vmatprep.subr.mxu0 0.0
  %330 = vmatpush2.msra.mxu0 0.0
  %331 = vmatprep.subr.mxu0 0.0
  %332 = vmatpush2.msra.mxu0 0.0
  %333 = vmatprep.subr.mxu0 0.0
  %334 = vmatpush2.msra.mxu0 0.0
  %335 = vmatprep.subr.mxu0 0.0
  %336 = vmatpush2.msra.mxu0 0.0
  %337 = vmatprep.subr.mxu0 0.0
  %338 = vmatpush2.msra.mxu0 0.0
  %339 = vmatprep.subr.mxu0 0.0
  %340 = vmatpush2.msra.mxu0 0.0
  %341 = vmatprep.subr.mxu0 0.0
  %342 = vmatpush2.msra.mxu0 0.0
  %343 = vmatprep.subr.mxu0 0.0
  %344 = vmatpush2.msra.mxu0 0.0
  %345 = vmatprep.subr.mxu0 0.0
  %346 = vmatpush2.msra.mxu0 0.0
  %347 = vmatprep.subr.mxu0 0.0
  %348 = vmatpush2.msra.mxu0 0.0
  %349 = vmatprep.mubr.f32.mxu0 0.0
  %350 = vmatmul.mubr.f32.gmra.mxu0 %v262
  %v351 = vpop.f32.mrf.mxu0
  %v352 = vadd.f32 %v230, %v351
  %v353 = vpop.f32.mrf.mxu0
  %354 = vmatprep.mubr.f32.mxu0 0.0
  %355 = vmatmul.mubr.f32.gmra.mxu0 %v265
  %v356 = vpop.f32.mrf.mxu0
  %v357 = vadd.f32 %v234, %v356
  %v358 = vpop.f32.mrf.mxu0
  %359 = vmatprep.mubr.f32.mxu0 0.0
  %360 = vmatmul.mubr.f32.gmra.mxu0 %v268
  %v361 = vpop.f32.mrf.mxu0
  %v362 = vadd.f32 %v238, %v361
  %v363 = vpop.f32.mrf.mxu0
  %364 = vmatprep.mubr.f32.mxu0 0.0
  %365 = vmatmul.mubr.f32.gmra.mxu0 %v271
  %v366 = vpop.f32.mrf.mxu0
  %v367 = vadd.f32 %v242, %v366
  %v368 = vpop.f32.mrf.mxu0
  %369 = vmatprep.mubr.f32.mxu0 0.0
  %370 = vmatmul.mubr.f32.gmra.mxu0 %v274
  %v371 = vpop.f32.mrf.mxu0
  %v372 = vadd.f32 %v246, %v371
  %v373 = vpop.f32.mrf.mxu0
  %374 = vmatprep.mubr.f32.mxu0 0.0
  %375 = vmatmul.mubr.f32.gmra.mxu0 %v277
  %v376 = vpop.f32.mrf.mxu0
  %v377 = vadd.f32 %v250, %v376
  %v378 = vpop.f32.mrf.mxu0
  %379 = vmatprep.mubr.f32.mxu0 0.0
  %380 = vmatmul.mubr.f32.gmra.mxu0 %v280
  %v381 = vpop.f32.mrf.mxu0
  %v382 = vadd.f32 %v254, %v381
  %v383 = vpop.f32.mrf.mxu0
  %384 = vmatprep.mubr.f32.mxu0 0.0
  %385 = vmatmul.mubr.f32.gmra.mxu0 %v283
  %v386 = vpop.f32.mrf.mxu0
  %v387 = vadd.f32 %v258, %v386
  %v388 = vpop.f32.mrf.mxu0
  %389 = vdwg.mxu0
  %v390 = vmax.f32 %v352, 0.0
  %v391 = vmax.f32 %v357, 0.0
  %v392 = vmax.f32 %v362, 0.0
  %v393 = vmax.f32 %v367, 0.0
  %v394 = vmax.f32 %v372, 0.0
  %v395 = vmax.f32 %v377, 0.0
  %v396 = vmax.f32 %v382, 0.0
  %v397 = vmax.f32 %v387, 0.0
  %v398 = vld [vmem:[%s3] sm:$0x3]
  %399 = vset.pattern.permute.xlu0 2
  %400 = vperm.xlu0 %399, %v20
  %v401 = vpop.permute.xlu0 %400
  %v404 = vsel %vm260, %v398, 0
  %406 = vmatprep.subr.mxu0 0.0
  %407 = vmatpush1.msra.mxu0 0.0
  %408 = vmatprep.subr.mxu0 0.0
  %409 = vmatpush1.msra.mxu0 0.0
  %410 = vmatprep.subr.mxu0 0.0
  %411 = vmatpush1.msra.mxu0 0.0
  %412 = vmatprep.subr.mxu0 0.0
  %413 = vmatpush1.msra.mxu0 0.0
  %414 = vmatprep.subr.mxu0 0.0
  %415 = vmatpush1.msra.mxu0 0.0
  %416 = vmatprep.subr.mxu0 0.0
  %417 = vmatpush1.msra.mxu0 0.0
  %418 = vmatprep.subr.mxu0 0.0
  %419 = vmatpush1.msra.mxu0 0.0
  %420 = vmatprep.subr.mxu0 0.0
  %421 = vmatpush1.msra.mxu0 0.0
  %422 = vmatprep.subr.mxu0 0.0
  %423 = vmatpush1.msra.mxu0 %v397
  %424 = vmatprep.subr.mxu0 0.0
  %425 = vmatpush1.msra.mxu0 %v396
  %426 = vmatprep.subr.mxu0 0.0
  %427 = vmatpush1.msra.mxu0 %v395
  %428 = vmatprep.subr.mxu0 0.0
  %429 = vmatpush1.msra.mxu0 %v394
  %430 = vmatprep.subr.mxu0 0.0
  %431 = vmatpush1.msra.mxu0 %v393
  %432 = vmatprep.subr.mxu0 0.0
  %433 = vmatpush1.msra.mxu0 %v392
  %434 = vmatprep.subr.mxu0 0.0
  %435 = vmatpush1.msra.mxu0 %v391
  %436 = vmatprep.subr.mxu0 0.0
  %437 = vmatpush1.msra.mxu0 %v390
  %438 = vmatprep.subr.mxu0 0.0
  %439 = vmatpush2.msra.mxu0 0.0
  %440 = vmatprep.subr.mxu0 0.0
  %441 = vmatpush2.msra.mxu0 0.0
  %442 = vmatprep.subr.mxu0 0.0
  %443 = vmatpush2.msra.mxu0 0.0
  %444 = vmatprep.subr.mxu0 0.0
  %445 = vmatpush2.msra.mxu0 0.0
  %446 = vmatprep.subr.mxu0 0.0
  %447 = vmatpush2.msra.mxu0 0.0
  %448 = vmatprep.subr.mxu0 0.0
  %449 = vmatpush2.msra.mxu0 0.0
  %450 = vmatprep.subr.mxu0 0.0
  %451 = vmatpush2.msra.mxu0 0.0
  %452 = vmatprep.subr.mxu0 0.0
  %453 = vmatpush2.msra.mxu0 0.0
  %454 = vmatprep.subr.mxu0 0.0
  %455 = vmatpush2.msra.mxu0 0.0
  %456 = vmatprep.subr.mxu0 0.0
  %457 = vmatpush2.msra.mxu0 0.0
  %458 = vmatprep.subr.mxu0 0.0
  %459 = vmatpush2.msra.mxu0 0.0
  %460 = vmatprep.subr.mxu0 0.0
  %461 = vmatpush2.msra.mxu0 0.0
  %462 = vmatprep.subr.mxu0 0.0
  %463 = vmatpush2.msra.mxu0 0.0
  %464 = vmatprep.subr.mxu0 0.0
  %465 = vmatpush2.msra.mxu0 0.0
  %466 = vmatprep.subr.mxu0 0.0
  %467 = vmatpush2.msra.mxu0 0.0
  %468 = vmatprep.subr.mxu0 0.0
  %469 = vmatpush2.msra.mxu0 0.0
  %470 = vmatprep.mubr.f32.mxu0 0.0
  %471 = vmatmul.mubr.f32.gmra.mxu0 %v404
  %v472 = vpop.f32.mrf.mxu0
  %v473 = vadd.f32 %v401, %v472
  %v474 = vpop.f32.mrf.mxu0
  %475 = vdwg.mxu0
  %vm476 = vcmask 1041408
  %v477 = vsel %vm476, %v473, inf
  %v478 = vrot.slane %v477, 4
  %v479 = vmin.f32 %v477, %v478
  %v480 = vrot.slane %v479, 2
  %v481 = vmin.f32 %v479, %v480
  %v482 = vrot.slane %v481, 1
  %v483 = vmin.f32 %v481, %v482
  %484 = vst [vmem:[%s5] sm:$0x1] %v483
  // Predicated region
  $region22: #{sac_critic_forward.1} parent=0 // pred_check
    _
  $region23: #{sac_critic_forward.1} parent=0 // pred_check_branch
    %486 = sbr.rel (0) target = $region25
  $region24: #{sac_critic_forward.1} parent=0 // pred_region
    _
  $region25: #{sac_critic_forward.1} parent=0 // pred_fallthru
    _
  // Predicated region
  $region26: #{sac_critic_forward.1} parent=0 // pred_check
    _
  $region27: #{sac_critic_forward.1} parent=0 // pred_check_branch
    %488 = sbr.rel (0) target = $region29
  $region28: #{sac_critic_forward.1} parent=0 // pred_region
    _
  $region29: #{sac_critic_forward.1} parent=0 // pred_fallthru
    _

</llo_original>
